<compile_context>
chip_gen: v7x
topology: tpu7x:2x2x1
jax: 0.10.0
libtpu: 0.0.40
codegen_flags: <defaults>
</compile_context>

<pallas_src>
import math

import jax
import jax.numpy as jnp
from jax.experimental import pallas as pl
from jax.experimental.pallas import tpu as pltpu


def _gelu_exact(v):
    # matches torch.nn.functional.gelu (erf form)
    inv_sqrt2 = jnp.float32(0.7071067811865476)
    return 0.5 * v * (1.0 + jax.lax.erf(v * inv_sqrt2))


# ---------------------------------------------------------------------------
# In-kernel helper: one full GATv2 layer (projection + attention + aggregation)
# on a dense masked edge matrix.  Returns the row-major [N, C] node output.
# ---------------------------------------------------------------------------
def _gatv2_layer(x, mask, ea, slab_ref, sc_ref):
    """slab_ref: VMEM [Fin+2, 2C]  rows 0..Fin-1 = [w_r | w_l],
                                   row Fin       = [b_r | b_l],
                                   row Fin+1     = [bias_out | 0]
       sc_ref:   SMEM [2C]         att (C) ++ w_e (C)  (per-channel scalars)"""
    fin = slab_ref.shape[0] - 2
    c = slab_ref.shape[1] // 2
    slab = slab_ref[...]

    # fused lin_r / lin_l projection: ONE MXU matmul, sliced afterwards.
    proj = jnp.dot(x, slab[:fin, :], preferred_element_type=jnp.float32) \
        + slab[fin:fin + 1, :]
    x_r = proj[:, :c]                      # [N, C]  destination-side projection
    x_l = proj[:, c:]                      # [N, C]  source-side projection
    x_l_t = x_l.T                          # [C, N]  tiny XLU transpose (N on lanes)
    bias_out = slab[fin + 1:fin + 2, :c]   # [1, C]  output bias

    # logits[i,j] = sum_c att[c]*leaky_relu(x_r[i,c] + x_l[j,c] + w_e[c]*ea[i,j], 0.2)
    # leaky_relu(s, 0.2) == 0.6*s + 0.4*|s|: the linear part collapses to rank-1 terms
    # built once; only the att[c]*|s_c| term stays in the per-channel unrolled loop.
    n = ea.shape[0]
    lin_i = jnp.zeros((n, 1), jnp.float32)   # sum_c att[c]*x_r[i,c]
    lin_j = jnp.zeros((1, n), jnp.float32)   # sum_c att[c]*x_l[j,c]
    att_we = jnp.float32(0.0)                # sum_c att[c]*w_e[c]
    abs_acc = jnp.zeros_like(ea)             # sum_c att[c]*|s_c|
    for ci in range(c):
        a_c = sc_ref[ci]                     # SMEM scalar reads
        w_c = sc_ref[c + ci]
        col = x_r[:, ci:ci + 1]              # [N, 1]
        row = x_l_t[ci:ci + 1, :]            # [1, N]
        lin_i = lin_i + a_c * col
        lin_j = lin_j + a_c * row
        att_we = att_we + a_c * w_c
        s_c = (col + row) + w_c * ea
        abs_acc = abs_acc + a_c * jnp.abs(s_c)
    logits = 0.6 * ((lin_i + lin_j) + att_we * ea) + 0.4 * abs_acc

    # masked softmax over source nodes j (== scatter-softmax over incoming edges)
    logits = jnp.where(mask, logits, jnp.float32(-1e30))
    m = jnp.max(logits, axis=-1, keepdims=True)
    p = jnp.where(mask, jnp.exp(logits - m), 0.0)
    denom = jnp.maximum(jnp.sum(p, axis=-1, keepdims=True), jnp.float32(1e-30))
    inv = pl.reciprocal(denom, approx=True)    # EUP slot
    inv = inv * (2.0 - denom * inv)            # one Newton step -> near-exact row sums
    alpha = p * inv

    # aggregate: out[i] = sum_j alpha[i,j] * x_l[j] + bias   (single MXU matmul)
    return jnp.dot(alpha, x_l, preferred_element_type=jnp.float32) + bias_out


# ---------------------------------------------------------------------------
# Fused kernel: GATv2(in->mid) + GELU + GATv2(mid->out) in a single pallas_call.
# ---------------------------------------------------------------------------
def _decoder_kernel(x_ref, eam_ref, w1_ref, sc1_ref, w2_ref, sc2_ref, out_ref):
    eam = eam_ref[...]                            # [N, N]; -inf marks "no edge"
    mask = eam > jnp.float32(-jnp.inf)
    ea = jnp.where(mask, eam, 0.0)

    h = _gatv2_layer(x_ref[...], mask, ea, w1_ref, sc1_ref)   # layer 1
    h = _gelu_exact(h)                                        # GELU once
    out = _gatv2_layer(h, mask, ea, w2_ref, sc2_ref)          # layer 2
    out_ref[...] = out.astype(out_ref.dtype)


# ---------------------------------------------------------------------------
# Plain-JAX glue: edge list -> single dense [N_dst, N_src] edge-attribute matrix
# with a -inf sentinel on missing edges.  Mirrors PyG remove_self_loops +
# add_self_loops(fill_value='mean').  Assumes no duplicate edges (duplicates
# would overwrite instead of following PyG scatter-softmax semantics).
# ---------------------------------------------------------------------------
def edges_to_dense_masked(e_i, e_a, n):
    src, dst = e_i[0], e_i[1]
    adj = jnp.zeros((n, n), jnp.float32).at[dst, src].set(1.0)
    ea = jnp.zeros((n, n), jnp.float32).at[dst, src].set(e_a[:, 0])
    eye = jnp.eye(n, dtype=jnp.float32)
    adj = adj * (1.0 - eye)                      # remove existing self loops
    ea = ea * (1.0 - eye)
    deg = adj.sum(axis=1)
    loop_val = jnp.where(deg > 0.0, ea.sum(axis=1) / jnp.maximum(deg, 1.0), 0.0)
    adj = adj + eye                              # add self loops
    ea = ea + jnp.diag(loop_val)                 # self-loop attr = mean of incoming
    return jnp.where(adj > 0.0, ea, -jnp.inf)    # single dense matrix; -inf == no edge


def _pack_layer_params(p):
    """Pack one GATv2 layer into (VMEM slab [Fin+2, 2C], SMEM scalars [2C])."""
    c = p["w_l"].shape[1]
    w = jnp.concatenate([p["w_r"], p["w_l"]], axis=1)                        # [Fin, 2C]
    b = jnp.concatenate([p["b_r"], p["b_l"]], axis=1)                        # [1, 2C]
    ob = jnp.concatenate([p["bias"], jnp.zeros((1, c), jnp.float32)], axis=1)
    slab = jnp.concatenate([w, b, ob], axis=0)                               # [Fin+2, 2C]
    scalars = jnp.concatenate([p["att"][0], p["w_e"][0]])                    # [2C]
    return slab, scalars


def attention_decoder(x, e_i, e_a, params1, params2):
    n = x.shape[0]
    c2 = params2["w_l"].shape[1]
    eam = edges_to_dense_masked(e_i, e_a, n)
    slab1, sc1 = _pack_layer_params(params1)
    slab2, sc2 = _pack_layer_params(params2)

    vmem = pl.BlockSpec(memory_space=pltpu.MemorySpace.VMEM)
    smem = pl.BlockSpec(memory_space=pltpu.MemorySpace.SMEM)
    # TODO(synk): for large N, switch to a flash-style grid (N_dst "parallel" x N_src
    # "arbitrary" with online softmax), build each masked edge block in-kernel from the
    # edge list via PrefetchScalarGridSpec (avoid the O(N^2) eam materialization in XLA),
    # emit a lane-dense [C2, N] output, and set vmem_limit_bytes per generation (v7x has
    # 64 MiB VMEM / 2 TCs).  The whole-graph-in-VMEM form below is right for tiny graphs.
    return pl.pallas_call(
        _decoder_kernel,
        out_shape=jax.ShapeDtypeStruct((n, c2), jnp.float32),
        in_specs=[vmem, vmem, vmem, smem, vmem, smem],
        out_specs=vmem,
    )(x, eam, slab1, sc1, slab2, sc2)


# ---------------------------------------------------------------------------
# Deterministic parameter init (glorot weights, zero biases, like PyG).
# ---------------------------------------------------------------------------
def _glorot(key, shape):
    lim = math.sqrt(6.0 / (shape[0] + shape[1]))
    return jax.random.uniform(key, shape, jnp.float32, -lim, lim)


def init_gatv2(key, fin, fout):
    ks = jax.random.split(key, 4)
    return dict(
        w_l=_glorot(ks[0], (fin, fout)), b_l=jnp.zeros((1, fout), jnp.float32),
        w_r=_glorot(ks[1], (fin, fout)), b_r=jnp.zeros((1, fout), jnp.float32),
        w_e=_glorot(ks[2], (1, fout)),                     # lin_edge (edge_dim=1, no bias)
        att=_glorot(ks[3], (1, fout)),
        bias=jnp.zeros((1, fout), jnp.float32),
    )


if __name__ == "__main__":
    # small shapes: N=16 nodes, in_channels=8, out_channels=4  ->  mid=(8+4)//2=6
    N, IN_C, OUT_C = 16, 8, 4
    MID = (IN_C + OUT_C) // 2
    HEADS = 1   # module default attention_heads=1; kernel implements heads=1
    # TODO(synk): multi-head (heads>1, concat) variant not implemented.

    key = jax.random.PRNGKey(0)
    kx, ke, k1, k2 = jax.random.split(key, 4)

    x = jax.random.normal(kx, (N, IN_C), jnp.float32)

    # deterministic edge list: each node receives edges from (i+1)%N and (i+5)%N
    dst = jnp.arange(N, dtype=jnp.int32)
    src = jnp.concatenate([(dst + 1) % N, (dst + 5) % N])
    e_i = jnp.stack([src, jnp.concatenate([dst, dst])]).astype(jnp.int32)   # [2, 32]
    e_a = jax.random.normal(ke, (e_i.shape[1], 1), jnp.float32)             # [32, 1]

    p1 = init_gatv2(k1, IN_C, MID)
    p2 = init_gatv2(k2, MID, OUT_C)

    out = jax.jit(attention_decoder)(x, e_i, e_a, p1, p2)
    jax.block_until_ready(out)
    assert out.shape == (N, OUT_C) and out.dtype == jnp.float32
    assert bool(jnp.all(jnp.isfinite(out)))
    print("KERNEL_OK")
</pallas_src>

<mosaic_0001>
module attributes {stable_mosaic.version = 11 : i64} {
  func.func @_decoder_kernel(%arg0: memref<16x8xf32, #tpu.memory_space<vmem>>, %arg1: memref<16x16xf32, #tpu.memory_space<vmem>>, %arg2: memref<10x12xf32, #tpu.memory_space<vmem>>, %arg3: memref<12xf32, #tpu.memory_space<smem>>, %arg4: memref<8x8xf32, #tpu.memory_space<vmem>>, %arg5: memref<8xf32, #tpu.memory_space<smem>>, %arg6: memref<16x4xf32, #tpu.memory_space<vmem>>) attributes {dimension_semantics = [], scalar_prefetch = 0 : i64, scratch_operands = 0 : i64, tpu.core_type = #tpu.core_type<tc>} {
    %c0 = arith.constant 0 : index
    %c0_0 = arith.constant 0 : index
    %0 = vector.load %arg1[%c0, %c0_0] : memref<16x16xf32, #tpu.memory_space<vmem>>, vector<16x16xf32>
    %cst = arith.constant 0xFF800000 : f32
    %1 = vector.broadcast %cst : f32 to vector<16x16xf32>
    %2 = arith.cmpf ogt, %0, %1 : vector<16x16xf32>
    %cst_1 = arith.constant 0.000000e+00 : f32
    %3 = vector.broadcast %cst_1 : f32 to vector<16x16xf32>
    %4 = arith.select %2, %0, %3 : vector<16x16xi1>, vector<16x16xf32>
    %c0_2 = arith.constant 0 : index
    %c0_3 = arith.constant 0 : index
    %5 = vector.load %arg0[%c0_2, %c0_3] : memref<16x8xf32, #tpu.memory_space<vmem>>, vector<16x8xf32>
    %c0_4 = arith.constant 0 : index
    %c0_5 = arith.constant 0 : index
    %6 = vector.load %arg2[%c0_4, %c0_5] : memref<10x12xf32, #tpu.memory_space<vmem>>, vector<10x12xf32>
    %7 = vector.extract_strided_slice %6 {offsets = [0, 0], sizes = [8, 12], strides = [1, 1]} : vector<10x12xf32> to vector<8x12xf32>
    %cst_6 = arith.constant dense<0.000000e+00> : vector<16x12xf32>
    %8 = tpu.matmul %5, %7, %cst_6 {dimension_numbers = #tpu.dot_dimension_numbers<[1], [0], [0], [1], [0, 0, 1, 1], [], []>} : vector<16x8xf32>, vector<8x12xf32>, vector<16x12xf32> -> vector<16x12xf32>
    %9 = vector.extract_strided_slice %6 {offsets = [8, 0], sizes = [1, 12], strides = [1, 1]} : vector<10x12xf32> to vector<1x12xf32>
    %10 = vector.broadcast %9 : vector<1x12xf32> to vector<16x12xf32>
    %11 = arith.addf %8, %10 : vector<16x12xf32>
    %12 = vector.extract_strided_slice %11 {offsets = [0, 0], sizes = [16, 6], strides = [1, 1]} : vector<16x12xf32> to vector<16x6xf32>
    %13 = vector.extract_strided_slice %11 {offsets = [0, 6], sizes = [16, 6], strides = [1, 1]} : vector<16x12xf32> to vector<16x6xf32>
    %14 = tpu.transpose %13, [1, 0] : vector<16x6xf32> -> vector<6x16xf32>
    %15 = vector.extract_strided_slice %6 {offsets = [9, 0], sizes = [1, 6], strides = [1, 1]} : vector<10x12xf32> to vector<1x6xf32>
    %cst_7 = arith.constant 0.000000e+00 : f32
    %16 = vector.broadcast %cst_7 : f32 to vector<16x1xf32>
    %cst_8 = arith.constant 0.000000e+00 : f32
    %17 = vector.broadcast %cst_8 : f32 to vector<1x16xf32>
    %cst_9 = arith.constant 0.000000e+00 : f32
    %18 = vector.broadcast %cst_9 : f32 to vector<16x16xf32>
    %c0_10 = arith.constant 0 : index
    %19 = memref.load %arg3[%c0_10] : memref<12xf32, #tpu.memory_space<smem>>
    %c6 = arith.constant 6 : index
    %20 = memref.load %arg3[%c6] : memref<12xf32, #tpu.memory_space<smem>>
    %21 = vector.extract_strided_slice %12 {offsets = [0, 0], sizes = [16, 1], strides = [1, 1]} : vector<16x6xf32> to vector<16x1xf32>
    %22 = vector.extract_strided_slice %14 {offsets = [0, 0], sizes = [1, 16], strides = [1, 1]} : vector<6x16xf32> to vector<1x16xf32>
    %23 = vector.broadcast %19 : f32 to vector<16x1xf32>
    %24 = arith.mulf %23, %21 : vector<16x1xf32>
    %25 = arith.addf %16, %24 : vector<16x1xf32>
    %26 = vector.broadcast %19 : f32 to vector<1x16xf32>
    %27 = arith.mulf %26, %22 : vector<1x16xf32>
    %28 = arith.addf %17, %27 : vector<1x16xf32>
    %29 = arith.mulf %19, %20 : f32
    %cst_11 = arith.constant 0.000000e+00 : f32
    %30 = arith.addf %cst_11, %29 : f32
    %31 = vector.broadcast %21 : vector<16x1xf32> to vector<16x16xf32>
    %32 = vector.broadcast %22 : vector<1x16xf32> to vector<16x16xf32>
    %33 = arith.addf %31, %32 : vector<16x16xf32>
    %34 = vector.broadcast %20 : f32 to vector<16x16xf32>
    %35 = arith.mulf %34, %4 : vector<16x16xf32>
    %36 = arith.addf %33, %35 : vector<16x16xf32>
    %37 = math.absf %36 : vector<16x16xf32>
    %38 = vector.broadcast %19 : f32 to vector<16x16xf32>
    %39 = arith.mulf %38, %37 : vector<16x16xf32>
    %40 = arith.addf %18, %39 : vector<16x16xf32>
    %c1 = arith.constant 1 : index
    %41 = memref.load %arg3[%c1] : memref<12xf32, #tpu.memory_space<smem>>
    %c7 = arith.constant 7 : index
    %42 = memref.load %arg3[%c7] : memref<12xf32, #tpu.memory_space<smem>>
    %43 = vector.extract_strided_slice %12 {offsets = [0, 1], sizes = [16, 1], strides = [1, 1]} : vector<16x6xf32> to vector<16x1xf32>
    %44 = vector.extract_strided_slice %14 {offsets = [1, 0], sizes = [1, 16], strides = [1, 1]} : vector<6x16xf32> to vector<1x16xf32>
    %45 = vector.broadcast %41 : f32 to vector<16x1xf32>
    %46 = arith.mulf %45, %43 : vector<16x1xf32>
    %47 = arith.addf %25, %46 : vector<16x1xf32>
    %48 = vector.broadcast %41 : f32 to vector<1x16xf32>
    %49 = arith.mulf %48, %44 : vector<1x16xf32>
    %50 = arith.addf %28, %49 : vector<1x16xf32>
    %51 = arith.mulf %41, %42 : f32
    %52 = arith.addf %30, %51 : f32
    %53 = vector.broadcast %43 : vector<16x1xf32> to vector<16x16xf32>
    %54 = vector.broadcast %44 : vector<1x16xf32> to vector<16x16xf32>
    %55 = arith.addf %53, %54 : vector<16x16xf32>
    %56 = vector.broadcast %42 : f32 to vector<16x16xf32>
    %57 = arith.mulf %56, %4 : vector<16x16xf32>
    %58 = arith.addf %55, %57 : vector<16x16xf32>
    %59 = math.absf %58 : vector<16x16xf32>
    %60 = vector.broadcast %41 : f32 to vector<16x16xf32>
    %61 = arith.mulf %60, %59 : vector<16x16xf32>
    %62 = arith.addf %40, %61 : vector<16x16xf32>
    %c2 = arith.constant 2 : index
    %63 = memref.load %arg3[%c2] : memref<12xf32, #tpu.memory_space<smem>>
    %c8 = arith.constant 8 : index
    %64 = memref.load %arg3[%c8] : memref<12xf32, #tpu.memory_space<smem>>
    %65 = vector.extract_strided_slice %12 {offsets = [0, 2], sizes = [16, 1], strides = [1, 1]} : vector<16x6xf32> to vector<16x1xf32>
    %66 = vector.extract_strided_slice %14 {offsets = [2, 0], sizes = [1, 16], strides = [1, 1]} : vector<6x16xf32> to vector<1x16xf32>
    %67 = vector.broadcast %63 : f32 to vector<16x1xf32>
    %68 = arith.mulf %67, %65 : vector<16x1xf32>
    %69 = arith.addf %47, %68 : vector<16x1xf32>
    %70 = vector.broadcast %63 : f32 to vector<1x16xf32>
    %71 = arith.mulf %70, %66 : vector<1x16xf32>
    %72 = arith.addf %50, %71 : vector<1x16xf32>
    %73 = arith.mulf %63, %64 : f32
    %74 = arith.addf %52, %73 : f32
    %75 = vector.broadcast %65 : vector<16x1xf32> to vector<16x16xf32>
    %76 = vector.broadcast %66 : vector<1x16xf32> to vector<16x16xf32>
    %77 = arith.addf %75, %76 : vector<16x16xf32>
    %78 = vector.broadcast %64 : f32 to vector<16x16xf32>
    %79 = arith.mulf %78, %4 : vector<16x16xf32>
    %80 = arith.addf %77, %79 : vector<16x16xf32>
    %81 = math.absf %80 : vector<16x16xf32>
    %82 = vector.broadcast %63 : f32 to vector<16x16xf32>
    %83 = arith.mulf %82, %81 : vector<16x16xf32>
    %84 = arith.addf %62, %83 : vector<16x16xf32>
    %c3 = arith.constant 3 : index
    %85 = memref.load %arg3[%c3] : memref<12xf32, #tpu.memory_space<smem>>
    %c9 = arith.constant 9 : index
    %86 = memref.load %arg3[%c9] : memref<12xf32, #tpu.memory_space<smem>>
    %87 = vector.extract_strided_slice %12 {offsets = [0, 3], sizes = [16, 1], strides = [1, 1]} : vector<16x6xf32> to vector<16x1xf32>
    %88 = vector.extract_strided_slice %14 {offsets = [3, 0], sizes = [1, 16], strides = [1, 1]} : vector<6x16xf32> to vector<1x16xf32>
    %89 = vector.broadcast %85 : f32 to vector<16x1xf32>
    %90 = arith.mulf %89, %87 : vector<16x1xf32>
    %91 = arith.addf %69, %90 : vector<16x1xf32>
    %92 = vector.broadcast %85 : f32 to vector<1x16xf32>
    %93 = arith.mulf %92, %88 : vector<1x16xf32>
    %94 = arith.addf %72, %93 : vector<1x16xf32>
    %95 = arith.mulf %85, %86 : f32
    %96 = arith.addf %74, %95 : f32
    %97 = vector.broadcast %87 : vector<16x1xf32> to vector<16x16xf32>
    %98 = vector.broadcast %88 : vector<1x16xf32> to vector<16x16xf32>
    %99 = arith.addf %97, %98 : vector<16x16xf32>
    %100 = vector.broadcast %86 : f32 to vector<16x16xf32>
    %101 = arith.mulf %100, %4 : vector<16x16xf32>
    %102 = arith.addf %99, %101 : vector<16x16xf32>
    %103 = math.absf %102 : vector<16x16xf32>
    %104 = vector.broadcast %85 : f32 to vector<16x16xf32>
    %105 = arith.mulf %104, %103 : vector<16x16xf32>
    %106 = arith.addf %84, %105 : vector<16x16xf32>
    %c4 = arith.constant 4 : index
    %107 = memref.load %arg3[%c4] : memref<12xf32, #tpu.memory_space<smem>>
    %c10 = arith.constant 10 : index
    %108 = memref.load %arg3[%c10] : memref<12xf32, #tpu.memory_space<smem>>
    %109 = vector.extract_strided_slice %12 {offsets = [0, 4], sizes = [16, 1], strides = [1, 1]} : vector<16x6xf32> to vector<16x1xf32>
    %110 = vector.extract_strided_slice %14 {offsets = [4, 0], sizes = [1, 16], strides = [1, 1]} : vector<6x16xf32> to vector<1x16xf32>
    %111 = vector.broadcast %107 : f32 to vector<16x1xf32>
    %112 = arith.mulf %111, %109 : vector<16x1xf32>
    %113 = arith.addf %91, %112 : vector<16x1xf32>
    %114 = vector.broadcast %107 : f32 to vector<1x16xf32>
    %115 = arith.mulf %114, %110 : vector<1x16xf32>
    %116 = arith.addf %94, %115 : vector<1x16xf32>
    %117 = arith.mulf %107, %108 : f32
    %118 = arith.addf %96, %117 : f32
    %119 = vector.broadcast %109 : vector<16x1xf32> to vector<16x16xf32>
    %120 = vector.broadcast %110 : vector<1x16xf32> to vector<16x16xf32>
    %121 = arith.addf %119, %120 : vector<16x16xf32>
    %122 = vector.broadcast %108 : f32 to vector<16x16xf32>
    %123 = arith.mulf %122, %4 : vector<16x16xf32>
    %124 = arith.addf %121, %123 : vector<16x16xf32>
    %125 = math.absf %124 : vector<16x16xf32>
    %126 = vector.broadcast %107 : f32 to vector<16x16xf32>
    %127 = arith.mulf %126, %125 : vector<16x16xf32>
    %128 = arith.addf %106, %127 : vector<16x16xf32>
    %c5 = arith.constant 5 : index
    %129 = memref.load %arg3[%c5] : memref<12xf32, #tpu.memory_space<smem>>
    %c11 = arith.constant 11 : index
    %130 = memref.load %arg3[%c11] : memref<12xf32, #tpu.memory_space<smem>>
    %131 = vector.extract_strided_slice %12 {offsets = [0, 5], sizes = [16, 1], strides = [1, 1]} : vector<16x6xf32> to vector<16x1xf32>
    %132 = vector.extract_strided_slice %14 {offsets = [5, 0], sizes = [1, 16], strides = [1, 1]} : vector<6x16xf32> to vector<1x16xf32>
    %133 = vector.broadcast %129 : f32 to vector<16x1xf32>
    %134 = arith.mulf %133, %131 : vector<16x1xf32>
    %135 = arith.addf %113, %134 : vector<16x1xf32>
    %136 = vector.broadcast %129 : f32 to vector<1x16xf32>
    %137 = arith.mulf %136, %132 : vector<1x16xf32>
    %138 = arith.addf %116, %137 : vector<1x16xf32>
    %139 = arith.mulf %129, %130 : f32
    %140 = arith.addf %118, %139 : f32
    %141 = vector.broadcast %131 : vector<16x1xf32> to vector<16x16xf32>
    %142 = vector.broadcast %132 : vector<1x16xf32> to vector<16x16xf32>
    %143 = arith.addf %141, %142 : vector<16x16xf32>
    %144 = vector.broadcast %130 : f32 to vector<16x16xf32>
    %145 = arith.mulf %144, %4 : vector<16x16xf32>
    %146 = arith.addf %143, %145 : vector<16x16xf32>
    %147 = math.absf %146 : vector<16x16xf32>
    %148 = vector.broadcast %129 : f32 to vector<16x16xf32>
    %149 = arith.mulf %148, %147 : vector<16x16xf32>
    %150 = arith.addf %128, %149 : vector<16x16xf32>
    %151 = vector.broadcast %135 : vector<16x1xf32> to vector<16x16xf32>
    %152 = vector.broadcast %138 : vector<1x16xf32> to vector<16x16xf32>
    %153 = arith.addf %151, %152 : vector<16x16xf32>
    %154 = vector.broadcast %140 : f32 to vector<16x16xf32>
    %155 = arith.mulf %154, %4 : vector<16x16xf32>
    %156 = arith.addf %153, %155 : vector<16x16xf32>
    %cst_12 = arith.constant 6.000000e-01 : f32
    %157 = vector.broadcast %cst_12 : f32 to vector<16x16xf32>
    %158 = arith.mulf %157, %156 : vector<16x16xf32>
    %cst_13 = arith.constant 4.000000e-01 : f32
    %159 = vector.broadcast %cst_13 : f32 to vector<16x16xf32>
    %160 = arith.mulf %159, %150 : vector<16x16xf32>
    %161 = arith.addf %158, %160 : vector<16x16xf32>
    %cst_14 = arith.constant -1.000000e+30 : f32
    %162 = vector.broadcast %cst_14 : f32 to vector<16x16xf32>
    %163 = arith.select %2, %161, %162 : vector<16x16xi1>, vector<16x16xf32>
    %cst_15 = arith.constant dense<0xFF800000> : vector<16xf32>
    %164 = vector.multi_reduction <maximumf>, %163, %cst_15 [1] : vector<16x16xf32> to vector<16xf32>
    %165 = vector.shape_cast %164 : vector<16xf32> to vector<16x1xf32>
    %166 = vector.broadcast %165 : vector<16x1xf32> to vector<16x16xf32>
    %167 = arith.subf %163, %166 : vector<16x16xf32>
    %168 = math.exp %167 : vector<16x16xf32>
    %cst_16 = arith.constant 0.000000e+00 : f32
    %169 = vector.broadcast %cst_16 : f32 to vector<16x16xf32>
    %170 = arith.select %2, %168, %169 : vector<16x16xi1>, vector<16x16xf32>
    %cst_17 = arith.constant dense<0.000000e+00> : vector<16xf32>
    %171 = vector.multi_reduction <add>, %170, %cst_17 [1] : vector<16x16xf32> to vector<16xf32>
    %172 = vector.shape_cast %171 : vector<16xf32> to vector<16x1xf32>
    %cst_18 = arith.constant 1.000000e-30 : f32
    %173 = vector.broadcast %cst_18 : f32 to vector<16x1xf32>
    %174 = arith.maximumf %172, %173 : vector<16x1xf32>
    %175 = tpu.reciprocal %174 {approx = true} : vector<16x1xf32> -> vector<16x1xf32>
    %176 = arith.mulf %174, %175 : vector<16x1xf32>
    %cst_19 = arith.constant 2.000000e+00 : f32
    %177 = vector.broadcast %cst_19 : f32 to vector<16x1xf32>
    %178 = arith.subf %177, %176 : vector<16x1xf32>
    %179 = arith.mulf %175, %178 : vector<16x1xf32>
    %180 = vector.broadcast %179 : vector<16x1xf32> to vector<16x16xf32>
    %181 = arith.mulf %170, %180 : vector<16x16xf32>
    %cst_20 = arith.constant dense<0.000000e+00> : vector<16x6xf32>
    %182 = tpu.matmul %181, %13, %cst_20 {dimension_numbers = #tpu.dot_dimension_numbers<[1], [0], [0], [1], [0, 0, 1, 1], [], []>} : vector<16x16xf32>, vector<16x6xf32>, vector<16x6xf32> -> vector<16x6xf32>
    %183 = vector.broadcast %15 : vector<1x6xf32> to vector<16x6xf32>
    %184 = arith.addf %182, %183 : vector<16x6xf32>
    %cst_21 = arith.constant 5.000000e-01 : f32
    %185 = vector.broadcast %cst_21 : f32 to vector<16x6xf32>
    %186 = arith.mulf %185, %184 : vector<16x6xf32>
    %cst_22 = arith.constant 0.707106769 : f32
    %187 = vector.broadcast %cst_22 : f32 to vector<16x6xf32>
    %188 = arith.mulf %184, %187 : vector<16x6xf32>
    %189 = math.erf %188 : vector<16x6xf32>
    %cst_23 = arith.constant 1.000000e+00 : f32
    %190 = vector.broadcast %cst_23 : f32 to vector<16x6xf32>
    %191 = arith.addf %190, %189 : vector<16x6xf32>
    %192 = arith.mulf %186, %191 : vector<16x6xf32>
    %c0_24 = arith.constant 0 : index
    %c0_25 = arith.constant 0 : index
    %193 = vector.load %arg4[%c0_24, %c0_25] : memref<8x8xf32, #tpu.memory_space<vmem>>, vector<8x8xf32>
    %194 = vector.extract_strided_slice %193 {offsets = [0, 0], sizes = [6, 8], strides = [1, 1]} : vector<8x8xf32> to vector<6x8xf32>
    %cst_26 = arith.constant dense<0.000000e+00> : vector<16x8xf32>
    %195 = tpu.matmul %192, %194, %cst_26 {dimension_numbers = #tpu.dot_dimension_numbers<[1], [0], [0], [1], [0, 0, 1, 1], [], []>} : vector<16x6xf32>, vector<6x8xf32>, vector<16x8xf32> -> vector<16x8xf32>
    %196 = vector.extract_strided_slice %193 {offsets = [6, 0], sizes = [1, 8], strides = [1, 1]} : vector<8x8xf32> to vector<1x8xf32>
    %197 = vector.broadcast %196 : vector<1x8xf32> to vector<16x8xf32>
    %198 = arith.addf %195, %197 : vector<16x8xf32>
    %199 = vector.extract_strided_slice %198 {offsets = [0, 0], sizes = [16, 4], strides = [1, 1]} : vector<16x8xf32> to vector<16x4xf32>
    %200 = vector.extract_strided_slice %198 {offsets = [0, 4], sizes = [16, 4], strides = [1, 1]} : vector<16x8xf32> to vector<16x4xf32>
    %201 = tpu.transpose %200, [1, 0] : vector<16x4xf32> -> vector<4x16xf32>
    %202 = vector.extract_strided_slice %193 {offsets = [7, 0], sizes = [1, 4], strides = [1, 1]} : vector<8x8xf32> to vector<1x4xf32>
    %cst_27 = arith.constant 0.000000e+00 : f32
    %203 = vector.broadcast %cst_27 : f32 to vector<16x1xf32>
    %cst_28 = arith.constant 0.000000e+00 : f32
    %204 = vector.broadcast %cst_28 : f32 to vector<1x16xf32>
    %cst_29 = arith.constant 0.000000e+00 : f32
    %205 = vector.broadcast %cst_29 : f32 to vector<16x16xf32>
    %c0_30 = arith.constant 0 : index
    %206 = memref.load %arg5[%c0_30] : memref<8xf32, #tpu.memory_space<smem>>
    %c4_31 = arith.constant 4 : index
    %207 = memref.load %arg5[%c4_31] : memref<8xf32, #tpu.memory_space<smem>>
    %208 = vector.extract_strided_slice %199 {offsets = [0, 0], sizes = [16, 1], strides = [1, 1]} : vector<16x4xf32> to vector<16x1xf32>
    %209 = vector.extract_strided_slice %201 {offsets = [0, 0], sizes = [1, 16], strides = [1, 1]} : vector<4x16xf32> to vector<1x16xf32>
    %210 = vector.broadcast %206 : f32 to vector<16x1xf32>
    %211 = arith.mulf %210, %208 : vector<16x1xf32>
    %212 = arith.addf %203, %211 : vector<16x1xf32>
    %213 = vector.broadcast %206 : f32 to vector<1x16xf32>
    %214 = arith.mulf %213, %209 : vector<1x16xf32>
    %215 = arith.addf %204, %214 : vector<1x16xf32>
    %216 = arith.mulf %206, %207 : f32
    %cst_32 = arith.constant 0.000000e+00 : f32
    %217 = arith.addf %cst_32, %216 : f32
    %218 = vector.broadcast %208 : vector<16x1xf32> to vector<16x16xf32>
    %219 = vector.broadcast %209 : vector<1x16xf32> to vector<16x16xf32>
    %220 = arith.addf %218, %219 : vector<16x16xf32>
    %221 = vector.broadcast %207 : f32 to vector<16x16xf32>
    %222 = arith.mulf %221, %4 : vector<16x16xf32>
    %223 = arith.addf %220, %222 : vector<16x16xf32>
    %224 = math.absf %223 : vector<16x16xf32>
    %225 = vector.broadcast %206 : f32 to vector<16x16xf32>
    %226 = arith.mulf %225, %224 : vector<16x16xf32>
    %227 = arith.addf %205, %226 : vector<16x16xf32>
    %c1_33 = arith.constant 1 : index
    %228 = memref.load %arg5[%c1_33] : memref<8xf32, #tpu.memory_space<smem>>
    %c5_34 = arith.constant 5 : index
    %229 = memref.load %arg5[%c5_34] : memref<8xf32, #tpu.memory_space<smem>>
    %230 = vector.extract_strided_slice %199 {offsets = [0, 1], sizes = [16, 1], strides = [1, 1]} : vector<16x4xf32> to vector<16x1xf32>
    %231 = vector.extract_strided_slice %201 {offsets = [1, 0], sizes = [1, 16], strides = [1, 1]} : vector<4x16xf32> to vector<1x16xf32>
    %232 = vector.broadcast %228 : f32 to vector<16x1xf32>
    %233 = arith.mulf %232, %230 : vector<16x1xf32>
    %234 = arith.addf %212, %233 : vector<16x1xf32>
    %235 = vector.broadcast %228 : f32 to vector<1x16xf32>
    %236 = arith.mulf %235, %231 : vector<1x16xf32>
    %237 = arith.addf %215, %236 : vector<1x16xf32>
    %238 = arith.mulf %228, %229 : f32
    %239 = arith.addf %217, %238 : f32
    %240 = vector.broadcast %230 : vector<16x1xf32> to vector<16x16xf32>
    %241 = vector.broadcast %231 : vector<1x16xf32> to vector<16x16xf32>
    %242 = arith.addf %240, %241 : vector<16x16xf32>
    %243 = vector.broadcast %229 : f32 to vector<16x16xf32>
    %244 = arith.mulf %243, %4 : vector<16x16xf32>
    %245 = arith.addf %242, %244 : vector<16x16xf32>
    %246 = math.absf %245 : vector<16x16xf32>
    %247 = vector.broadcast %228 : f32 to vector<16x16xf32>
    %248 = arith.mulf %247, %246 : vector<16x16xf32>
    %249 = arith.addf %227, %248 : vector<16x16xf32>
    %c2_35 = arith.constant 2 : index
    %250 = memref.load %arg5[%c2_35] : memref<8xf32, #tpu.memory_space<smem>>
    %c6_36 = arith.constant 6 : index
    %251 = memref.load %arg5[%c6_36] : memref<8xf32, #tpu.memory_space<smem>>
    %252 = vector.extract_strided_slice %199 {offsets = [0, 2], sizes = [16, 1], strides = [1, 1]} : vector<16x4xf32> to vector<16x1xf32>
    %253 = vector.extract_strided_slice %201 {offsets = [2, 0], sizes = [1, 16], strides = [1, 1]} : vector<4x16xf32> to vector<1x16xf32>
    %254 = vector.broadcast %250 : f32 to vector<16x1xf32>
    %255 = arith.mulf %254, %252 : vector<16x1xf32>
    %256 = arith.addf %234, %255 : vector<16x1xf32>
    %257 = vector.broadcast %250 : f32 to vector<1x16xf32>
    %258 = arith.mulf %257, %253 : vector<1x16xf32>
    %259 = arith.addf %237, %258 : vector<1x16xf32>
    %260 = arith.mulf %250, %251 : f32
    %261 = arith.addf %239, %260 : f32
    %262 = vector.broadcast %252 : vector<16x1xf32> to vector<16x16xf32>
    %263 = vector.broadcast %253 : vector<1x16xf32> to vector<16x16xf32>
    %264 = arith.addf %262, %263 : vector<16x16xf32>
    %265 = vector.broadcast %251 : f32 to vector<16x16xf32>
    %266 = arith.mulf %265, %4 : vector<16x16xf32>
    %267 = arith.addf %264, %266 : vector<16x16xf32>
    %268 = math.absf %267 : vector<16x16xf32>
    %269 = vector.broadcast %250 : f32 to vector<16x16xf32>
    %270 = arith.mulf %269, %268 : vector<16x16xf32>
    %271 = arith.addf %249, %270 : vector<16x16xf32>
    %c3_37 = arith.constant 3 : index
    %272 = memref.load %arg5[%c3_37] : memref<8xf32, #tpu.memory_space<smem>>
    %c7_38 = arith.constant 7 : index
    %273 = memref.load %arg5[%c7_38] : memref<8xf32, #tpu.memory_space<smem>>
    %274 = vector.extract_strided_slice %199 {offsets = [0, 3], sizes = [16, 1], strides = [1, 1]} : vector<16x4xf32> to vector<16x1xf32>
    %275 = vector.extract_strided_slice %201 {offsets = [3, 0], sizes = [1, 16], strides = [1, 1]} : vector<4x16xf32> to vector<1x16xf32>
    %276 = vector.broadcast %272 : f32 to vector<16x1xf32>
    %277 = arith.mulf %276, %274 : vector<16x1xf32>
    %278 = arith.addf %256, %277 : vector<16x1xf32>
    %279 = vector.broadcast %272 : f32 to vector<1x16xf32>
    %280 = arith.mulf %279, %275 : vector<1x16xf32>
    %281 = arith.addf %259, %280 : vector<1x16xf32>
    %282 = arith.mulf %272, %273 : f32
    %283 = arith.addf %261, %282 : f32
    %284 = vector.broadcast %274 : vector<16x1xf32> to vector<16x16xf32>
    %285 = vector.broadcast %275 : vector<1x16xf32> to vector<16x16xf32>
    %286 = arith.addf %284, %285 : vector<16x16xf32>
    %287 = vector.broadcast %273 : f32 to vector<16x16xf32>
    %288 = arith.mulf %287, %4 : vector<16x16xf32>
    %289 = arith.addf %286, %288 : vector<16x16xf32>
    %290 = math.absf %289 : vector<16x16xf32>
    %291 = vector.broadcast %272 : f32 to vector<16x16xf32>
    %292 = arith.mulf %291, %290 : vector<16x16xf32>
    %293 = arith.addf %271, %292 : vector<16x16xf32>
    %294 = vector.broadcast %278 : vector<16x1xf32> to vector<16x16xf32>
    %295 = vector.broadcast %281 : vector<1x16xf32> to vector<16x16xf32>
    %296 = arith.addf %294, %295 : vector<16x16xf32>
    %297 = vector.broadcast %283 : f32 to vector<16x16xf32>
    %298 = arith.mulf %297, %4 : vector<16x16xf32>
    %299 = arith.addf %296, %298 : vector<16x16xf32>
    %cst_39 = arith.constant 6.000000e-01 : f32
    %300 = vector.broadcast %cst_39 : f32 to vector<16x16xf32>
    %301 = arith.mulf %300, %299 : vector<16x16xf32>
    %cst_40 = arith.constant 4.000000e-01 : f32
    %302 = vector.broadcast %cst_40 : f32 to vector<16x16xf32>
    %303 = arith.mulf %302, %293 : vector<16x16xf32>
    %304 = arith.addf %301, %303 : vector<16x16xf32>
    %cst_41 = arith.constant -1.000000e+30 : f32
    %305 = vector.broadcast %cst_41 : f32 to vector<16x16xf32>
    %306 = arith.select %2, %304, %305 : vector<16x16xi1>, vector<16x16xf32>
    %cst_42 = arith.constant dense<0xFF800000> : vector<16xf32>
    %307 = vector.multi_reduction <maximumf>, %306, %cst_42 [1] : vector<16x16xf32> to vector<16xf32>
    %308 = vector.shape_cast %307 : vector<16xf32> to vector<16x1xf32>
    %309 = vector.broadcast %308 : vector<16x1xf32> to vector<16x16xf32>
    %310 = arith.subf %306, %309 : vector<16x16xf32>
    %311 = math.exp %310 : vector<16x16xf32>
    %cst_43 = arith.constant 0.000000e+00 : f32
    %312 = vector.broadcast %cst_43 : f32 to vector<16x16xf32>
    %313 = arith.select %2, %311, %312 : vector<16x16xi1>, vector<16x16xf32>
    %cst_44 = arith.constant dense<0.000000e+00> : vector<16xf32>
    %314 = vector.multi_reduction <add>, %313, %cst_44 [1] : vector<16x16xf32> to vector<16xf32>
    %315 = vector.shape_cast %314 : vector<16xf32> to vector<16x1xf32>
    %cst_45 = arith.constant 1.000000e-30 : f32
    %316 = vector.broadcast %cst_45 : f32 to vector<16x1xf32>
    %317 = arith.maximumf %315, %316 : vector<16x1xf32>
    %318 = tpu.reciprocal %317 {approx = true} : vector<16x1xf32> -> vector<16x1xf32>
    %319 = arith.mulf %317, %318 : vector<16x1xf32>
    %cst_46 = arith.constant 2.000000e+00 : f32
    %320 = vector.broadcast %cst_46 : f32 to vector<16x1xf32>
    %321 = arith.subf %320, %319 : vector<16x1xf32>
    %322 = arith.mulf %318, %321 : vector<16x1xf32>
    %323 = vector.broadcast %322 : vector<16x1xf32> to vector<16x16xf32>
    %324 = arith.mulf %313, %323 : vector<16x16xf32>
    %cst_47 = arith.constant dense<0.000000e+00> : vector<16x4xf32>
    %325 = tpu.matmul %324, %200, %cst_47 {dimension_numbers = #tpu.dot_dimension_numbers<[1], [0], [0], [1], [0, 0, 1, 1], [], []>} : vector<16x16xf32>, vector<16x4xf32>, vector<16x4xf32> -> vector<16x4xf32>
    %326 = vector.broadcast %202 : vector<1x4xf32> to vector<16x4xf32>
    %327 = arith.addf %325, %326 : vector<16x4xf32>
    %c0_48 = arith.constant 0 : index
    %c0_49 = arith.constant 0 : index
    %328 = vector.load %arg6[%c0_48, %c0_49] : memref<16x4xf32, #tpu.memory_space<vmem>>, vector<16x4xf32>
    tpu.vector_store %arg6[%c0_48, %c0_49], %327 {strides = array<i32>} : memref<16x4xf32, #tpu.memory_space<vmem>>, vector<16x4xf32>,
    return
  }
}

</mosaic_0001>

<llo_original>
// kernel: attention_decoder.1
$region0: #{attention_decoder.1}
  #allocation0 [shape = 'u32[]', space=smem, size = 0x4, offset = 0x4, fixed_abs, tag = 'smem constant byte address 0x4 - core index']
  #allocation1 [shape = 'u32[144,128]{1,0:T(1,128)}', space=vmem, size = 0x12000, scoped, tag = 'internal scratch']
  %s0 = inlined_call_operand.vmem [shape: f32[16,8], index: 0, kind: input, shape index: {}]
  %s1 = inlined_call_operand.vmem [shape: f32[16,16], index: 1, kind: input, shape index: {}]
  %s2 = inlined_call_operand.vmem [shape: f32[10,12], index: 2, kind: input, shape index: {}]
  %s3 = inlined_call_operand.vmem [shape: f32[12], index: 3, kind: input, shape index: {}]
  %s4 = inlined_call_operand.vmem [shape: f32[8,8], index: 4, kind: input, shape index: {}]
  %s5 = inlined_call_operand.vmem [shape: f32[8], index: 5, kind: input, shape index: {}]
  %s6 = inlined_call_operand.vmem [shape: f32[16,4], index: 6, kind: output, shape index: {}]
  %s7 = sld [smem:[#allocation0]]
  $region42: #{attention_decoder.1} parent=0
    _
  %s9 = ssub.s32 1, %s7
  %s10 = scalar_select 0, %s9, %s7
  $region1: #{attention_decoder.1} parent=0
    #allocation2 [shape = 'u8[512]{0}', space=smem, size = 0x200, scoped, tag = 'input window, operand 3, single buffered']
    #allocation3 [shape = 's32[1]{0}', space=sflag, size = 0x4, scoped, tag = 'scoped memory for attention_decoder.1']
    #allocation4 [shape = 'u8[512]{0}', space=smem, size = 0x200, scoped, tag = 'input window, operand 5, single buffered']
    #allocation5 [shape = 's32[1]{0}', space=sflag, size = 0x4, scoped, tag = 'scoped memory for attention_decoder.1']
    %11 = vsyncpa [#allocation3], 0
    %12 = vsyncpa [#allocation5], 0
    // Predicated region
    $region2: #{attention_decoder.1} parent=1 // pred_check
      _
    $region3: #{attention_decoder.1} parent=1 // pred_check_branch
      %14 = sbr.rel (0) target = $region5
    $region4: #{attention_decoder.1} parent=1 // pred_region
      _
    $region5: #{attention_decoder.1} parent=1 // pred_fallthru
      _
    // Predicated region
    $region6: #{attention_decoder.1} parent=1 // pred_check
      _
    $region7: #{attention_decoder.1} parent=1 // pred_check_branch
      %16 = sbr.rel (0) target = $region9
    $region8: #{attention_decoder.1} parent=1 // pred_region
      _
    $region9: #{attention_decoder.1} parent=1 // pred_fallthru
      _
    // Predicated region
    $region10: #{attention_decoder.1} parent=1 // pred_check
      _
    $region11: #{attention_decoder.1} parent=1 // pred_check_branch
      %18 = sbr.rel (0) target = $region13
    $region12: #{attention_decoder.1} parent=1 // pred_region
      _
    $region13: #{attention_decoder.1} parent=1 // pred_fallthru
      _
    // Predicated region
    $region14: #{attention_decoder.1} parent=1 // pred_check
      _
    $region15: #{attention_decoder.1} parent=1 // pred_check_branch
      %20 = sbr.rel (0) target = $region17
    $region16: #{attention_decoder.1} parent=1 // pred_region
      %s22 = ssub.s32 16, 16
      %23 = vsyncadd [#allocation3], %s22
      %s25 = sshll.u32 %s3, 4
      %s26 = int_to_ptr.vmem [resolvable:$true] %s25
      %28 = dma.vmem_to_smem %s26, 16, [#allocation2], [#allocation3]
    $region17: #{attention_decoder.1} parent=1 // pred_fallthru
      _
    // Predicated region
    $region18: #{attention_decoder.1} parent=1 // pred_check
      _
    $region19: #{attention_decoder.1} parent=1 // pred_check_branch
      %30 = sbr.rel (0) target = $region21
    $region20: #{attention_decoder.1} parent=1 // pred_region
      _
    $region21: #{attention_decoder.1} parent=1 // pred_fallthru
      _
    // Predicated region
    $region22: #{attention_decoder.1} parent=1 // pred_check
      _
    $region23: #{attention_decoder.1} parent=1 // pred_check_branch
      %32 = sbr.rel (0) target = $region25
    $region24: #{attention_decoder.1} parent=1 // pred_region
      %s34 = ssub.s32 16, 16
      %35 = vsyncadd [#allocation5], %s34
      %s37 = sshll.u32 %s5, 4
      %s38 = int_to_ptr.vmem [resolvable:$true] %s37
      %40 = dma.vmem_to_smem %s38, 16, [#allocation4], [#allocation5]
    $region25: #{attention_decoder.1} parent=1 // pred_fallthru
      _
    // Predicated region
    $region26: #{attention_decoder.1} parent=1 // pred_check
      _
    $region27: #{attention_decoder.1} parent=1 // pred_check_branch
      %42 = sbr.rel (0) target = $region29
    $region28: #{attention_decoder.1} parent=1 // pred_region
      %43 = dma.done [#allocation3], 16
    $region29: #{attention_decoder.1} parent=1 // pred_fallthru
      _
    // Predicated region
    $region30: #{attention_decoder.1} parent=1 // pred_check
      _
    $region31: #{attention_decoder.1} parent=1 // pred_check_branch
      %45 = sbr.rel (0) target = $region33
    $region32: #{attention_decoder.1} parent=1 // pred_region
      %46 = dma.done [#allocation5], 16
    $region33: #{attention_decoder.1} parent=1 // pred_fallthru
      _
    %47 = sfence
    %v48 = vld [vmem:[%s1] sm:$0xff]
    %v49 = vld [vmem:[%s1 + $0x8] sm:$0xff]
    %vm50 = vcmp.gt.f32.partialorder %v48, -inf
    %vm51 = vcmp.gt.f32.partialorder %v49, -inf
    %v52 = vsel %vm50, %v48, 0.0
    %v53 = vsel %vm51, %v49, 0.0
    %v54 = vld [vmem:[%s0] sm:$0xff]
    %v55 = vld [vmem:[%s0 + $0x8] sm:$0xff]
    %v56 = vld [vmem:[%s2] sm:$0xff]
    %v57 = vld [vmem:[%s2 + $0x8] sm:$0x3]
    %v58 = vlaneseq
    %v59 = vshrl.u32 %v58, 7
    %v60 = vsub.s32 0, %v59
    %v61 = vrot.slane %v57, %v60
    %vm62 = vcmask 64512
    %v64 = vsel %vm62, %v54, 0
    %v67 = vsel %vm62, %v55, 0
    %69 = vmatprep.subr.mxu0 0.0
    %70 = vmatpush1.msra.mxu0 %v56
    %71 = vmatprep.subr.mxu0 0.0
    %72 = vmatpush1.msra.mxu0 0.0
    %73 = vmatprep.subr.mxu0 0.0
    %74 = vmatpush1.msra.mxu0 0.0
    %75 = vmatprep.subr.mxu0 0.0
    %76 = vmatpush1.msra.mxu0 0.0
    %77 = vmatprep.subr.mxu0 0.0
    %78 = vmatpush1.msra.mxu0 0.0
    %79 = vmatprep.subr.mxu0 0.0
    %80 = vmatpush1.msra.mxu0 0.0
    %81 = vmatprep.subr.mxu0 0.0
    %82 = vmatpush1.msra.mxu0 0.0
    %83 = vmatprep.subr.mxu0 0.0
    %84 = vmatpush1.msra.mxu0 0.0
    %85 = vmatprep.subr.mxu0 0.0
    %86 = vmatpush1.msra.mxu0 0.0
    %87 = vmatprep.subr.mxu0 0.0
    %88 = vmatpush1.msra.mxu0 0.0
    %89 = vmatprep.subr.mxu0 0.0
    %90 = vmatpush1.msra.mxu0 0.0
    %91 = vmatprep.subr.mxu0 0.0
    %92 = vmatpush1.msra.mxu0 0.0
    %93 = vmatprep.subr.mxu0 0.0
    %94 = vmatpush1.msra.mxu0 0.0
    %95 = vmatprep.subr.mxu0 0.0
    %96 = vmatpush1.msra.mxu0 0.0
    %97 = vmatprep.subr.mxu0 0.0
    %98 = vmatpush1.msra.mxu0 0.0
    %99 = vmatprep.subr.mxu0 0.0
    %100 = vmatpush1.msra.mxu0 0.0
    %101 = vmatprep.subr.mxu0 0.0
    %102 = vmatpush1.msra.mxu0 0.0
    %103 = vmatprep.subr.mxu0 0.0
    %104 = vmatpush1.msra.mxu0 0.0
    %105 = vmatprep.subr.mxu0 0.0
    %106 = vmatpush1.msra.mxu0 0.0
    %107 = vmatprep.subr.mxu0 0.0
    %108 = vmatpush1.msra.mxu0 0.0
    %109 = vmatprep.subr.mxu0 0.0
    %110 = vmatpush1.msra.mxu0 0.0
    %111 = vmatprep.subr.mxu0 0.0
    %112 = vmatpush1.msra.mxu0 0.0
    %113 = vmatprep.subr.mxu0 0.0
    %114 = vmatpush1.msra.mxu0 0.0
    %115 = vmatprep.subr.mxu0 0.0
    %116 = vmatpush1.msra.mxu0 0.0
    %117 = vmatprep.subr.mxu0 0.0
    %118 = vmatpush1.msra.mxu0 0.0
    %119 = vmatprep.subr.mxu0 0.0
    %120 = vmatpush1.msra.mxu0 0.0
    %121 = vmatprep.subr.mxu0 0.0
    %122 = vmatpush1.msra.mxu0 0.0
    %123 = vmatprep.subr.mxu0 0.0
    %124 = vmatpush1.msra.mxu0 0.0
    %125 = vmatprep.subr.mxu0 0.0
    %126 = vmatpush1.msra.mxu0 0.0
    %127 = vmatprep.subr.mxu0 0.0
    %128 = vmatpush1.msra.mxu0 0.0
    %129 = vmatprep.subr.mxu0 0.0
    %130 = vmatpush1.msra.mxu0 0.0
    %131 = vmatprep.subr.mxu0 0.0
    %132 = vmatpush1.msra.mxu0 0.0
    %133 = vmatprep.mubr.f32.mxu0 0.0
    %134 = vmatmul.mubr.f32.gmra.mrb[0].mxu0 %v64
    %v135 = vpop.f32.mrb[0].mxu0
    %v136 = vadd.f32 %v61, %v135
    %v137 = vpop.f32.mrb[0].mxu0
    %138 = vmatprep.mubr.f32.mxu0 0.0
    %139 = vmatmul.mubr.f32.gmra.mrb[0].mxu0 %v67
    %v140 = vpop.f32.mrb[0].mxu0
    %v141 = vadd.f32 %v61, %v140
    %v142 = vpop.f32.mrb[0].mxu0
    %143 = vdwg.mxu0
    %146 = vrot.lane.b32.xlu0 %v136, 122
    %v147 = vpop.permute.xlu0 %146
    %148 = vrot.lane.b32.xlu0 %v141, 122
    %v149 = vpop.permute.xlu0 %148
    %152 = vxpose.xlu0.b32.start [1/16] %v147, 128
    %153 = vxpose.xlu0.b32.cont [2/16] %v149, 128
    %154 = vxpose.xlu0.b32.cont [3/16] 0.0, 128
    %155 = vxpose.xlu0.b32.cont [4/16] 0.0, 128
    %156 = vxpose.xlu0.b32.cont [5/16] 0.0, 128
    %157 = vxpose.xlu0.b32.cont [6/16] 0.0, 128
    %158 = vxpose.xlu0.b32.cont [7/16] 0.0, 128
    %159 = vxpose.xlu0.b32.cont [8/16] 0.0, 128
    %160 = vxpose.xlu0.b32.cont [9/16] 0.0, 128
    %161 = vxpose.xlu0.b32.cont [10/16] 0.0, 128
    %162 = vxpose.xlu0.b32.cont [11/16] 0.0, 128
    %163 = vxpose.xlu0.b32.cont [12/16] 0.0, 128
    %164 = vxpose.xlu0.b32.cont [13/16] 0.0, 128
    %165 = vxpose.xlu0.b32.cont [14/16] 0.0, 128
    %166 = vxpose.xlu0.b32.cont [15/16] 0.0, 128
    %167 = vxpose.xlu0.b32.end [16/16] 0.0, 128
    %v168 = vpop.trf.xlu0
    %v169 = vpop.trf.xlu0
    %v170 = vpop.trf.xlu0
    %v171 = vpop.trf.xlu0
    %v172 = vpop.trf.xlu0
    %v173 = vpop.trf.xlu0
    %v174 = vpop.trf.xlu0
    %v175 = vpop.trf.xlu0
    %v176 = vpop.trf.xlu0
    %v177 = vpop.trf.xlu0
    %v178 = vpop.trf.xlu0
    %v179 = vpop.trf.xlu0
    %v180 = vpop.trf.xlu0
    %v181 = vpop.trf.xlu0
    %v182 = vpop.trf.xlu0
    %v183 = vpop.trf.xlu0
    %s184 = sld [smem:[#allocation2]]
    %s185 = sld [smem:[#allocation2 + $0x6]]
    %v186 = vstv %s184
    %v187 = vmul.f32 %v186, %v136
    %v188 = vmul.f32 %v186, %v141
    %v189 = vadd.f32 %v187, 0.0
    %v190 = vadd.f32 %v188, 0.0
    %v191 = vmul.f32 %v186, %v168
    %v192 = vadd.f32 %v191, 0.0
    %s193 = smul.f32 %s184, %s185
    %s194 = sadd.f32 %s193, 0.0
    %195 = vset.pattern.permute.xlu0 0
    %196 = vperm.xlu0 %195, %v136
    %v197 = vpop.permute.xlu0 %196
    %199 = vset.pattern.permute.xlu0 0
    %200 = vperm.xlu0 %199, %v141
    %v201 = vpop.permute.xlu0 %200
    %v203 = vlaneseq
    %v204 = vshrl.u32 %v203, 7
    %v205 = vsub.s32 0, %v204
    %v206 = vrot.slane %v168, %v205
    %v207 = vadd.f32 %v197, %v206
    %v208 = vadd.f32 %v201, %v206
    %v209 = vstv %s185
    %v210 = vmul.f32 %v209, %v52
    %v211 = vmul.f32 %v209, %v53
    %v212 = vadd.f32 %v207, %v210
    %v213 = vadd.f32 %v208, %v211
    %v214 = vand.u32 2147483647, %v212
    %v215 = vand.u32 2147483647, %v213
    %v216 = vmul.f32 %v186, %v214
    %v217 = vmul.f32 %v186, %v215
    %v218 = vadd.f32 %v216, 0.0
    %v219 = vadd.f32 %v217, 0.0
    %s220 = sld [smem:[#allocation2 + $0x1]]
    %s221 = sld [smem:[#allocation2 + $0x7]]
    %v222 = vstv %s220
    %v223 = vmul.f32 %v222, %v136
    %v224 = vmul.f32 %v222, %v141
    %227 = vrot.lane.b32.xlu0 %v223, 127
    %v228 = vpop.permute.xlu0 %227
    %229 = vrot.lane.b32.xlu0 %v224, 127
    %v230 = vpop.permute.xlu0 %229
    %v233 = vadd.f32 %v189, %v228
    %v234 = vadd.f32 %v190, %v230
    %v235 = vmul.f32 %v222, %v168
    %v237 = vrot.slane %v235, 1
    %v239 = vadd.f32 %v192, %v237
    %s240 = smul.f32 %s220, %s221
    %s241 = sadd.f32 %s194, %s240
    %242 = vset.pattern.permute.xlu0 1
    %243 = vperm.xlu0 %242, %v136
    %v244 = vpop.permute.xlu0 %243
    %246 = vset.pattern.permute.xlu0 1
    %247 = vperm.xlu0 %246, %v141
    %v248 = vpop.permute.xlu0 %247
    %v250 = vlaneseq
    %v251 = vshrl.u32 %v250, 7
    %v252 = vsub.s32 1, %v251
    %v253 = vrot.slane %v168, %v252
    %v254 = vadd.f32 %v244, %v253
    %v255 = vadd.f32 %v248, %v253
    %v256 = vstv %s221
    %v257 = vmul.f32 %v256, %v52
    %v258 = vmul.f32 %v256, %v53
    %v259 = vadd.f32 %v254, %v257
    %v260 = vadd.f32 %v255, %v258
    %v261 = vand.u32 2147483647, %v259
    %v262 = vand.u32 2147483647, %v260
    %v263 = vmul.f32 %v222, %v261
    %v264 = vmul.f32 %v222, %v262
    %v265 = vadd.f32 %v218, %v263
    %v266 = vadd.f32 %v219, %v264
    %s267 = sld [smem:[#allocation2 + $0x2]]
    %s268 = sld [smem:[#allocation2 + $0x8]]
    %v269 = vstv %s267
    %v270 = vmul.f32 %v269, %v136
    %v271 = vmul.f32 %v269, %v141
    %274 = vrot.lane.b32.xlu0 %v270, 126
    %v275 = vpop.permute.xlu0 %274
    %276 = vrot.lane.b32.xlu0 %v271, 126
    %v277 = vpop.permute.xlu0 %276
    %v280 = vadd.f32 %v233, %v275
    %v281 = vadd.f32 %v234, %v277
    %v282 = vmul.f32 %v269, %v168
    %v284 = vrot.slane %v282, 2
    %v286 = vadd.f32 %v239, %v284
    %s287 = smul.f32 %s267, %s268
    %s288 = sadd.f32 %s241, %s287
    %289 = vset.pattern.permute.xlu0 2
    %290 = vperm.xlu0 %289, %v136
    %v291 = vpop.permute.xlu0 %290
    %293 = vset.pattern.permute.xlu0 2
    %294 = vperm.xlu0 %293, %v141
    %v295 = vpop.permute.xlu0 %294
    %v297 = vlaneseq
    %v298 = vshrl.u32 %v297, 7
    %v299 = vsub.s32 2, %v298
    %v300 = vrot.slane %v168, %v299
    %v301 = vadd.f32 %v291, %v300
    %v302 = vadd.f32 %v295, %v300
    %v303 = vstv %s268
    %v304 = vmul.f32 %v303, %v52
    %v305 = vmul.f32 %v303, %v53
    %v306 = vadd.f32 %v301, %v304
    %v307 = vadd.f32 %v302, %v305
    %v308 = vand.u32 2147483647, %v306
    %v309 = vand.u32 2147483647, %v307
    %v310 = vmul.f32 %v269, %v308
    %v311 = vmul.f32 %v269, %v309
    %v312 = vadd.f32 %v265, %v310
    %v313 = vadd.f32 %v266, %v311
    %s314 = sld [smem:[#allocation2 + $0x3]]
    %s315 = sld [smem:[#allocation2 + $0x9]]
    %v316 = vstv %s314
    %v317 = vmul.f32 %v316, %v136
    %v318 = vmul.f32 %v316, %v141
    %321 = vrot.lane.b32.xlu0 %v317, 125
    %v322 = vpop.permute.xlu0 %321
    %323 = vrot.lane.b32.xlu0 %v318, 125
    %v324 = vpop.permute.xlu0 %323
    %v327 = vadd.f32 %v280, %v322
    %v328 = vadd.f32 %v281, %v324
    %v329 = vmul.f32 %v316, %v168
    %v331 = vrot.slane %v329, 3
    %v333 = vadd.f32 %v286, %v331
    %s334 = smul.f32 %s314, %s315
    %s335 = sadd.f32 %s288, %s334
    %336 = vset.pattern.permute.xlu0 3
    %337 = vperm.xlu0 %336, %v136
    %v338 = vpop.permute.xlu0 %337
    %340 = vset.pattern.permute.xlu0 3
    %341 = vperm.xlu0 %340, %v141
    %v342 = vpop.permute.xlu0 %341
    %v344 = vlaneseq
    %v345 = vshrl.u32 %v344, 7
    %v346 = vsub.s32 3, %v345
    %v347 = vrot.slane %v168, %v346
    %v348 = vadd.f32 %v338, %v347
    %v349 = vadd.f32 %v342, %v347
    %v350 = vstv %s315
    %v351 = vmul.f32 %v350, %v52
    %v352 = vmul.f32 %v350, %v53
    %v353 = vadd.f32 %v348, %v351
    %v354 = vadd.f32 %v349, %v352
    %v355 = vand.u32 2147483647, %v353
    %v356 = vand.u32 2147483647, %v354
    %v357 = vmul.f32 %v316, %v355
    %v358 = vmul.f32 %v316, %v356
    %v359 = vadd.f32 %v312, %v357
    %v360 = vadd.f32 %v313, %v358
    %s361 = sld [smem:[#allocation2 + $0x4]]
    %s362 = sld [smem:[#allocation2 + $0xa]]
    %v363 = vstv %s361
    %v364 = vmul.f32 %v363, %v136
    %v365 = vmul.f32 %v363, %v141
    %368 = vrot.lane.b32.xlu0 %v364, 124
    %v369 = vpop.permute.xlu0 %368
    %370 = vrot.lane.b32.xlu0 %v365, 124
    %v371 = vpop.permute.xlu0 %370
    %v374 = vadd.f32 %v327, %v369
    %v375 = vadd.f32 %v328, %v371
    %v376 = vmul.f32 %v363, %v168
    %v378 = vrot.slane %v376, 4
    %v380 = vadd.f32 %v333, %v378
    %s381 = smul.f32 %s361, %s362
    %s382 = sadd.f32 %s335, %s381
    %383 = vset.pattern.permute.xlu0 4
    %384 = vperm.xlu0 %383, %v136
    %v385 = vpop.permute.xlu0 %384
    %387 = vset.pattern.permute.xlu0 4
    %388 = vperm.xlu0 %387, %v141
    %v389 = vpop.permute.xlu0 %388
    %v391 = vlaneseq
    %v392 = vshrl.u32 %v391, 7
    %v393 = vsub.s32 4, %v392
    %v394 = vrot.slane %v168, %v393
    %v395 = vadd.f32 %v385, %v394
    %v396 = vadd.f32 %v389, %v394
    %v397 = vstv %s362
    %v398 = vmul.f32 %v397, %v52
    %v399 = vmul.f32 %v397, %v53
    %v400 = vadd.f32 %v395, %v398
    %v401 = vadd.f32 %v396, %v399
    %v402 = vand.u32 2147483647, %v400
    %v403 = vand.u32 2147483647, %v401
    %v404 = vmul.f32 %v363, %v402
    %v405 = vmul.f32 %v363, %v403
    %v406 = vadd.f32 %v359, %v404
    %v407 = vadd.f32 %v360, %v405
    %s408 = sld [smem:[#allocation2 + $0x5]]
    %s409 = sld [smem:[#allocation2 + $0xb]]
    %v410 = vstv %s408
    %v411 = vmul.f32 %v410, %v136
    %v412 = vmul.f32 %v410, %v141
    %415 = vrot.lane.b32.xlu0 %v411, 123
    %v416 = vpop.permute.xlu0 %415
    %417 = vrot.lane.b32.xlu0 %v412, 123
    %v418 = vpop.permute.xlu0 %417
    %v421 = vadd.f32 %v374, %v416
    %v422 = vadd.f32 %v375, %v418
    %v423 = vmul.f32 %v410, %v168
    %v425 = vrot.slane %v423, 5
    %v427 = vadd.f32 %v380, %v425
    %s428 = smul.f32 %s408, %s409
    %s429 = sadd.f32 %s382, %s428
    %430 = vset.pattern.permute.xlu0 5
    %431 = vperm.xlu0 %430, %v136
    %v432 = vpop.permute.xlu0 %431
    %434 = vset.pattern.permute.xlu0 5
    %435 = vperm.xlu0 %434, %v141
    %v436 = vpop.permute.xlu0 %435
    %v438 = vlaneseq
    %v439 = vshrl.u32 %v438, 7
    %v440 = vsub.s32 5, %v439
    %v441 = vrot.slane %v168, %v440
    %v442 = vadd.f32 %v432, %v441
    %v443 = vadd.f32 %v436, %v441
    %v444 = vstv %s409
    %v445 = vmul.f32 %v444, %v52
    %v446 = vmul.f32 %v444, %v53
    %v447 = vadd.f32 %v442, %v445
    %v448 = vadd.f32 %v443, %v446
    %v449 = vand.u32 2147483647, %v447
    %v450 = vand.u32 2147483647, %v448
    %v451 = vmul.f32 %v410, %v449
    %v452 = vmul.f32 %v410, %v450
    %v453 = vadd.f32 %v406, %v451
    %v454 = vadd.f32 %v407, %v452
    %456 = vset.pattern.permute.xlu0 0
    %457 = vperm.xlu0 %456, %v421
    %v458 = vpop.permute.xlu0 %457
    %461 = vset.pattern.permute.xlu0 0
    %462 = vperm.xlu0 %461, %v422
    %v463 = vpop.permute.xlu0 %462
    %v465 = vlaneseq
    %v466 = vshrl.u32 %v465, 7
    %v467 = vsub.s32 0, %v466
    %v468 = vrot.slane %v427, %v467
    %v469 = vadd.f32 %v458, %v468
    %v470 = vadd.f32 %v463, %v468
    %v471 = vstv %s429
    %v472 = vmul.f32 %v471, %v52
    %v473 = vmul.f32 %v471, %v53
    %v474 = vadd.f32 %v469, %v472
    %v475 = vadd.f32 %v470, %v473
    %v476 = vmul.f32 %v474, 0.6
    %v477 = vmul.f32 %v475, 0.6
    %v478 = vmul.f32 %v453, 0.4
    %v479 = vmul.f32 %v454, 0.4
    %v480 = vadd.f32 %v476, %v478
    %v481 = vadd.f32 %v477, %v479
    %v482 = vsel %vm50, %v480, -1e+30
    %v483 = vsel %vm51, %v481, -1e+30
    %vm484 = vcmask 130048
    %v485 = vsel %vm484, %v482, -inf
    %486 = vmax.xlane.f32.xlu0 %v485
    %v487 = vpop.xlane.xlu0 %486
    %v488 = vsel %vm484, %v483, -inf
    %489 = vmax.xlane.f32.xlu0 %v488
    %v490 = vpop.xlane.xlu0 %489
    %v491 = vsub.f32 %v482, %v487
    %v492 = vsub.f32 %v483, %v490
    %v493 = vmul.f32 %v491, 1.442695
    %v494 = vpow.pop %v493
    %v495 = vmul.f32 %v492, 1.442695
    %v496 = vpow.pop %v495
    %v497 = vsel %vm50, %v494, 0.0
    %v498 = vsel %vm51, %v496, 0.0
    %v499 = vsel %vm484, %v497, 0.0
    %500 = vadd.xlane.f32.xlu0 %v499
    %v501 = vpop.xlane.xlu0 %500
    %v502 = vsel %vm484, %v498, 0.0
    %503 = vadd.xlane.f32.xlu0 %v502
    %v504 = vpop.xlane.xlu0 %503
    %v505 = vmax.f32 %v501, 1e-30
    %v506 = vmax.f32 %v504, 1e-30
    %v507 = vrcp.pop %v505
    %v508 = vrcp.pop %v506
    %v509 = vmul.f32 %v505, %v507
    %v510 = vmul.f32 %v506, %v508
    %v511 = vsub.f32 2.0, %v509
    %v512 = vsub.f32 2.0, %v510
    %v513 = vmul.f32 %v507, %v511
    %v514 = vmul.f32 %v508, %v512
    %v515 = vmul.f32 %v497, %v513
    %v516 = vmul.f32 %v498, %v514
    %v517 = vlaneseq
    %v518 = vshrl.u32 %v517, 7
    %v519 = vsub.s32 1, %v518
    %v520 = vrot.slane %v57, %v519
    %v522 = vsel %vm484, %v515, 0
    %v525 = vsel %vm484, %v516, 0
    %527 = vmatprep.subr.mxu0 0.0
    %528 = vmatpush1.msra.mxu0 %v147
    %529 = vmatprep.subr.mxu0 0.0
    %530 = vmatpush1.msra.mxu0 %v149
    %531 = vmatprep.subr.mxu0 0.0
    %532 = vmatpush1.msra.mxu0 0.0
    %533 = vmatprep.subr.mxu0 0.0
    %534 = vmatpush1.msra.mxu0 0.0
    %535 = vmatprep.subr.mxu0 0.0
    %536 = vmatpush1.msra.mxu0 0.0
    %537 = vmatprep.subr.mxu0 0.0
    %538 = vmatpush1.msra.mxu0 0.0
    %539 = vmatprep.subr.mxu0 0.0
    %540 = vmatpush1.msra.mxu0 0.0
    %541 = vmatprep.subr.mxu0 0.0
    %542 = vmatpush1.msra.mxu0 0.0
    %543 = vmatprep.subr.mxu0 0.0
    %544 = vmatpush1.msra.mxu0 0.0
    %545 = vmatprep.subr.mxu0 0.0
    %546 = vmatpush1.msra.mxu0 0.0
    %547 = vmatprep.subr.mxu0 0.0
    %548 = vmatpush1.msra.mxu0 0.0
    %549 = vmatprep.subr.mxu0 0.0
    %550 = vmatpush1.msra.mxu0 0.0
    %551 = vmatprep.subr.mxu0 0.0
    %552 = vmatpush1.msra.mxu0 0.0
    %553 = vmatprep.subr.mxu0 0.0
    %554 = vmatpush1.msra.mxu0 0.0
    %555 = vmatprep.subr.mxu0 0.0
    %556 = vmatpush1.msra.mxu0 0.0
    %557 = vmatprep.subr.mxu0 0.0
    %558 = vmatpush1.msra.mxu0 0.0
    %559 = vmatprep.subr.mxu0 0.0
    %560 = vmatpush1.msra.mxu0 0.0
    %561 = vmatprep.subr.mxu0 0.0
    %562 = vmatpush1.msra.mxu0 0.0
    %563 = vmatprep.subr.mxu0 0.0
    %564 = vmatpush1.msra.mxu0 0.0
    %565 = vmatprep.subr.mxu0 0.0
    %566 = vmatpush1.msra.mxu0 0.0
    %567 = vmatprep.subr.mxu0 0.0
    %568 = vmatpush1.msra.mxu0 0.0
    %569 = vmatprep.subr.mxu0 0.0
    %570 = vmatpush1.msra.mxu0 0.0
    %571 = vmatprep.subr.mxu0 0.0
    %572 = vmatpush1.msra.mxu0 0.0
    %573 = vmatprep.subr.mxu0 0.0
    %574 = vmatpush1.msra.mxu0 0.0
    %575 = vmatprep.subr.mxu0 0.0
    %576 = vmatpush1.msra.mxu0 0.0
    %577 = vmatprep.subr.mxu0 0.0
    %578 = vmatpush1.msra.mxu0 0.0
    %579 = vmatprep.subr.mxu0 0.0
    %580 = vmatpush1.msra.mxu0 0.0
    %581 = vmatprep.subr.mxu0 0.0
    %582 = vmatpush1.msra.mxu0 0.0
    %583 = vmatprep.subr.mxu0 0.0
    %584 = vmatpush1.msra.mxu0 0.0
    %585 = vmatprep.subr.mxu0 0.0
    %586 = vmatpush1.msra.mxu0 0.0
    %587 = vmatprep.subr.mxu0 0.0
    %588 = vmatpush1.msra.mxu0 0.0
    %589 = vmatprep.subr.mxu0 0.0
    %590 = vmatpush1.msra.mxu0 0.0
    %591 = vmatprep.mubr.f32.mxu0 0.0
    %592 = vmatmul.mubr.f32.gmra.mrb[0].mxu0 %v522
    %v593 = vpop.f32.mrb[0].mxu0
    %v594 = vadd.f32 %v520, %v593
    %v595 = vpop.f32.mrb[0].mxu0
    %596 = vmatprep.mubr.f32.mxu0 0.0
    %597 = vmatmul.mubr.f32.gmra.mrb[0].mxu0 %v525
    %v598 = vpop.f32.mrb[0].mxu0
    %v599 = vadd.f32 %v520, %v598
    %v600 = vpop.f32.mrb[0].mxu0
    %601 = vdwg.mxu0
    %v602 = vmul.f32 %v594, 0.5
    %v603 = vmul.f32 %v599, 0.5
    %v604 = vmul.f32 %v594, 0.70710677
    %v605 = vmul.f32 %v599, 0.70710677
    %v606 = verf.f32.pop %v604
    %v607 = verf.f32.pop %v605
    %v608 = vadd.f32 %v606, 1.0
    %v609 = vadd.f32 %v607, 1.0
    %v610 = vmul.f32 %v602, %v608
    %v611 = vmul.f32 %v603, %v609
    %v612 = vld [vmem:[%s4] sm:$0xff]
    %v613 = vlaneseq
    %v614 = vshrl.u32 %v613, 7
    %v615 = vsub.s32 6, %v614
    %v616 = vrot.slane %v612, %v615
    %vm617 = vcmask 48128
    %v619 = vsel %vm617, %v610, 0
    %v622 = vsel %vm617, %v611, 0
    %vm624 = vcmask 1045504
    %v626 = vsel %vm624, %v612, 0
    %628 = vmatprep.subr.mxu0 0.0
    %629 = vmatpush1.msra.mxu0 %v626
    %630 = vmatprep.subr.mxu0 0.0
    %631 = vmatpush1.msra.mxu0 0.0
    %632 = vmatprep.subr.mxu0 0.0
    %633 = vmatpush1.msra.mxu0 0.0
    %634 = vmatprep.subr.mxu0 0.0
    %635 = vmatpush1.msra.mxu0 0.0
    %636 = vmatprep.subr.mxu0 0.0
    %637 = vmatpush1.msra.mxu0 0.0
    %638 = vmatprep.subr.mxu0 0.0
    %639 = vmatpush1.msra.mxu0 0.0
    %640 = vmatprep.subr.mxu0 0.0
    %641 = vmatpush1.msra.mxu0 0.0
    %642 = vmatprep.subr.mxu0 0.0
    %643 = vmatpush1.msra.mxu0 0.0
    %644 = vmatprep.subr.mxu0 0.0
    %645 = vmatpush1.msra.mxu0 0.0
    %646 = vmatprep.subr.mxu0 0.0
    %647 = vmatpush1.msra.mxu0 0.0
    %648 = vmatprep.subr.mxu0 0.0
    %649 = vmatpush1.msra.mxu0 0.0
    %650 = vmatprep.subr.mxu0 0.0
    %651 = vmatpush1.msra.mxu0 0.0
    %652 = vmatprep.subr.mxu0 0.0
    %653 = vmatpush1.msra.mxu0 0.0
    %654 = vmatprep.subr.mxu0 0.0
    %655 = vmatpush1.msra.mxu0 0.0
    %656 = vmatprep.subr.mxu0 0.0
    %657 = vmatpush1.msra.mxu0 0.0
    %658 = vmatprep.subr.mxu0 0.0
    %659 = vmatpush1.msra.mxu0 0.0
    %660 = vmatprep.subr.mxu0 0.0
    %661 = vmatpush1.msra.mxu0 0.0
    %662 = vmatprep.subr.mxu0 0.0
    %663 = vmatpush1.msra.mxu0 0.0
    %664 = vmatprep.subr.mxu0 0.0
    %665 = vmatpush1.msra.mxu0 0.0
    %666 = vmatprep.subr.mxu0 0.0
    %667 = vmatpush1.msra.mxu0 0.0
    %668 = vmatprep.subr.mxu0 0.0
    %669 = vmatpush1.msra.mxu0 0.0
    %670 = vmatprep.subr.mxu0 0.0
    %671 = vmatpush1.msra.mxu0 0.0
    %672 = vmatprep.subr.mxu0 0.0
    %673 = vmatpush1.msra.mxu0 0.0
    %674 = vmatprep.subr.mxu0 0.0
    %675 = vmatpush1.msra.mxu0 0.0
    %676 = vmatprep.subr.mxu0 0.0
    %677 = vmatpush1.msra.mxu0 0.0
    %678 = vmatprep.subr.mxu0 0.0
    %679 = vmatpush1.msra.mxu0 0.0
    %680 = vmatprep.subr.mxu0 0.0
    %681 = vmatpush1.msra.mxu0 0.0
    %682 = vmatprep.subr.mxu0 0.0
    %683 = vmatpush1.msra.mxu0 0.0
    %684 = vmatprep.subr.mxu0 0.0
    %685 = vmatpush1.msra.mxu0 0.0
    %686 = vmatprep.subr.mxu0 0.0
    %687 = vmatpush1.msra.mxu0 0.0
    %688 = vmatprep.subr.mxu0 0.0
    %689 = vmatpush1.msra.mxu0 0.0
    %690 = vmatprep.subr.mxu0 0.0
    %691 = vmatpush1.msra.mxu0 0.0
    %692 = vmatprep.mubr.f32.mxu0 0.0
    %693 = vmatmul.mubr.f32.gmra.mrb[0].mxu0 %v619
    %v694 = vpop.f32.mrb[0].mxu0
    %v695 = vadd.f32 %v616, %v694
    %v696 = vpop.f32.mrb[0].mxu0
    %697 = vmatprep.mubr.f32.mxu0 0.0
    %698 = vmatmul.mubr.f32.gmra.mrb[0].mxu0 %v622
    %v699 = vpop.f32.mrb[0].mxu0
    %v700 = vadd.f32 %v616, %v699
    %v701 = vpop.f32.mrb[0].mxu0
    %702 = vdwg.mxu0
    %705 = vrot.lane.b32.xlu0 %v695, 124
    %v706 = vpop.permute.xlu0 %705
    %707 = vrot.lane.b32.xlu0 %v700, 124
    %v708 = vpop.permute.xlu0 %707
    %711 = vxpose.xlu0.b32.start [1/16] %v706, 128
    %712 = vxpose.xlu0.b32.cont [2/16] %v708, 128
    %713 = vxpose.xlu0.b32.cont [3/16] 0.0, 128
    %714 = vxpose.xlu0.b32.cont [4/16] 0.0, 128
    %715 = vxpose.xlu0.b32.cont [5/16] 0.0, 128
    %716 = vxpose.xlu0.b32.cont [6/16] 0.0, 128
    %717 = vxpose.xlu0.b32.cont [7/16] 0.0, 128
    %718 = vxpose.xlu0.b32.cont [8/16] 0.0, 128
    %719 = vxpose.xlu0.b32.cont [9/16] 0.0, 128
    %720 = vxpose.xlu0.b32.cont [10/16] 0.0, 128
    %721 = vxpose.xlu0.b32.cont [11/16] 0.0, 128
    %722 = vxpose.xlu0.b32.cont [12/16] 0.0, 128
    %723 = vxpose.xlu0.b32.cont [13/16] 0.0, 128
    %724 = vxpose.xlu0.b32.cont [14/16] 0.0, 128
    %725 = vxpose.xlu0.b32.cont [15/16] 0.0, 128
    %726 = vxpose.xlu0.b32.end [16/16] 0.0, 128
    %v727 = vpop.trf.xlu0
    %v728 = vpop.trf.xlu0
    %v729 = vpop.trf.xlu0
    %v730 = vpop.trf.xlu0
    %v731 = vpop.trf.xlu0
    %v732 = vpop.trf.xlu0
    %v733 = vpop.trf.xlu0
    %v734 = vpop.trf.xlu0
    %v735 = vpop.trf.xlu0
    %v736 = vpop.trf.xlu0
    %v737 = vpop.trf.xlu0
    %v738 = vpop.trf.xlu0
    %v739 = vpop.trf.xlu0
    %v740 = vpop.trf.xlu0
    %v741 = vpop.trf.xlu0
    %v742 = vpop.trf.xlu0
    %s743 = sld [smem:[#allocation4]]
    %s744 = sld [smem:[#allocation4 + $0x4]]
    %v745 = vstv %s743
    %v746 = vmul.f32 %v745, %v695
    %v747 = vmul.f32 %v745, %v700
    %v748 = vadd.f32 %v746, 0.0
    %v749 = vadd.f32 %v747, 0.0
    %v750 = vmul.f32 %v745, %v727
    %v751 = vadd.f32 %v750, 0.0
    %s752 = smul.f32 %s743, %s744
    %s753 = sadd.f32 %s752, 0.0
    %754 = vset.pattern.permute.xlu0 0
    %755 = vperm.xlu0 %754, %v695
    %v756 = vpop.permute.xlu0 %755
    %758 = vset.pattern.permute.xlu0 0
    %759 = vperm.xlu0 %758, %v700
    %v760 = vpop.permute.xlu0 %759
    %v762 = vlaneseq
    %v763 = vshrl.u32 %v762, 7
    %v764 = vsub.s32 0, %v763
    %v765 = vrot.slane %v727, %v764
    %v766 = vadd.f32 %v756, %v765
    %v767 = vadd.f32 %v760, %v765
    %v768 = vstv %s744
    %v769 = vmul.f32 %v768, %v52
    %v770 = vmul.f32 %v768, %v53
    %v771 = vadd.f32 %v766, %v769
    %v772 = vadd.f32 %v767, %v770
    %v773 = vand.u32 2147483647, %v771
    %v774 = vand.u32 2147483647, %v772
    %v775 = vmul.f32 %v745, %v773
    %v776 = vmul.f32 %v745, %v774
    %v777 = vadd.f32 %v775, 0.0
    %v778 = vadd.f32 %v776, 0.0
    %s779 = sld [smem:[#allocation4 + $0x1]]
    %s780 = sld [smem:[#allocation4 + $0x5]]
    %v781 = vstv %s779
    %v782 = vmul.f32 %v781, %v695
    %v783 = vmul.f32 %v781, %v700
    %786 = vrot.lane.b32.xlu0 %v782, 127
    %v787 = vpop.permute.xlu0 %786
    %788 = vrot.lane.b32.xlu0 %v783, 127
    %v789 = vpop.permute.xlu0 %788
    %v792 = vadd.f32 %v748, %v787
    %v793 = vadd.f32 %v749, %v789
    %v794 = vmul.f32 %v781, %v727
    %v796 = vrot.slane %v794, 1
    %v798 = vadd.f32 %v751, %v796
    %s799 = smul.f32 %s779, %s780
    %s800 = sadd.f32 %s753, %s799
    %801 = vset.pattern.permute.xlu0 1
    %802 = vperm.xlu0 %801, %v695
    %v803 = vpop.permute.xlu0 %802
    %805 = vset.pattern.permute.xlu0 1
    %806 = vperm.xlu0 %805, %v700
    %v807 = vpop.permute.xlu0 %806
    %v809 = vlaneseq
    %v810 = vshrl.u32 %v809, 7
    %v811 = vsub.s32 1, %v810
    %v812 = vrot.slane %v727, %v811
    %v813 = vadd.f32 %v803, %v812
    %v814 = vadd.f32 %v807, %v812
    %v815 = vstv %s780
    %v816 = vmul.f32 %v815, %v52
    %v817 = vmul.f32 %v815, %v53
    %v818 = vadd.f32 %v813, %v816
    %v819 = vadd.f32 %v814, %v817
    %v820 = vand.u32 2147483647, %v818
    %v821 = vand.u32 2147483647, %v819
    %v822 = vmul.f32 %v781, %v820
    %v823 = vmul.f32 %v781, %v821
    %v824 = vadd.f32 %v777, %v822
    %v825 = vadd.f32 %v778, %v823
    %s826 = sld [smem:[#allocation4 + $0x2]]
    %s827 = sld [smem:[#allocation4 + $0x6]]
    %v828 = vstv %s826
    %v829 = vmul.f32 %v828, %v695
    %v830 = vmul.f32 %v828, %v700
    %833 = vrot.lane.b32.xlu0 %v829, 126
    %v834 = vpop.permute.xlu0 %833
    %835 = vrot.lane.b32.xlu0 %v830, 126
    %v836 = vpop.permute.xlu0 %835
    %v839 = vadd.f32 %v792, %v834
    %v840 = vadd.f32 %v793, %v836
    %v841 = vmul.f32 %v828, %v727
    %v843 = vrot.slane %v841, 2
    %v845 = vadd.f32 %v798, %v843
    %s846 = smul.f32 %s826, %s827
    %s847 = sadd.f32 %s800, %s846
    %848 = vset.pattern.permute.xlu0 2
    %849 = vperm.xlu0 %848, %v695
    %v850 = vpop.permute.xlu0 %849
    %852 = vset.pattern.permute.xlu0 2
    %853 = vperm.xlu0 %852, %v700
    %v854 = vpop.permute.xlu0 %853
    %v856 = vlaneseq
    %v857 = vshrl.u32 %v856, 7
    %v858 = vsub.s32 2, %v857
    %v859 = vrot.slane %v727, %v858
    %v860 = vadd.f32 %v850, %v859
    %v861 = vadd.f32 %v854, %v859
    %v862 = vstv %s827
    %v863 = vmul.f32 %v862, %v52
    %v864 = vmul.f32 %v862, %v53
    %v865 = vadd.f32 %v860, %v863
    %v866 = vadd.f32 %v861, %v864
    %v867 = vand.u32 2147483647, %v865
    %v868 = vand.u32 2147483647, %v866
    %v869 = vmul.f32 %v828, %v867
    %v870 = vmul.f32 %v828, %v868
    %v871 = vadd.f32 %v824, %v869
    %v872 = vadd.f32 %v825, %v870
    %s873 = sld [smem:[#allocation4 + $0x3]]
    %s874 = sld [smem:[#allocation4 + $0x7]]
    %v875 = vstv %s873
    %v876 = vmul.f32 %v875, %v695
    %v877 = vmul.f32 %v875, %v700
    %880 = vrot.lane.b32.xlu0 %v876, 125
    %v881 = vpop.permute.xlu0 %880
    %882 = vrot.lane.b32.xlu0 %v877, 125
    %v883 = vpop.permute.xlu0 %882
    %v886 = vadd.f32 %v839, %v881
    %v887 = vadd.f32 %v840, %v883
    %v888 = vmul.f32 %v875, %v727
    %v890 = vrot.slane %v888, 3
    %v892 = vadd.f32 %v845, %v890
    %s893 = smul.f32 %s873, %s874
    %s894 = sadd.f32 %s847, %s893
    %895 = vset.pattern.permute.xlu0 3
    %896 = vperm.xlu0 %895, %v695
    %v897 = vpop.permute.xlu0 %896
    %899 = vset.pattern.permute.xlu0 3
    %900 = vperm.xlu0 %899, %v700
    %v901 = vpop.permute.xlu0 %900
    %v903 = vlaneseq
    %v904 = vshrl.u32 %v903, 7
    %v905 = vsub.s32 3, %v904
    %v906 = vrot.slane %v727, %v905
    %v907 = vadd.f32 %v897, %v906
    %v908 = vadd.f32 %v901, %v906
    %v909 = vstv %s874
    %v910 = vmul.f32 %v909, %v52
    %v911 = vmul.f32 %v909, %v53
    %v912 = vadd.f32 %v907, %v910
    %v913 = vadd.f32 %v908, %v911
    %v914 = vand.u32 2147483647, %v912
    %v915 = vand.u32 2147483647, %v913
    %v916 = vmul.f32 %v875, %v914
    %v917 = vmul.f32 %v875, %v915
    %v918 = vadd.f32 %v871, %v916
    %v919 = vadd.f32 %v872, %v917
    %921 = vset.pattern.permute.xlu0 0
    %922 = vperm.xlu0 %921, %v886
    %v923 = vpop.permute.xlu0 %922
    %926 = vset.pattern.permute.xlu0 0
    %927 = vperm.xlu0 %926, %v887
    %v928 = vpop.permute.xlu0 %927
    %v930 = vlaneseq
    %v931 = vshrl.u32 %v930, 7
    %v932 = vsub.s32 0, %v931
    %v933 = vrot.slane %v892, %v932
    %v934 = vadd.f32 %v923, %v933
    %v935 = vadd.f32 %v928, %v933
    %v936 = vstv %s894
    %v937 = vmul.f32 %v936, %v52
    %v938 = vmul.f32 %v936, %v53
    %v939 = vadd.f32 %v934, %v937
    %v940 = vadd.f32 %v935, %v938
    %v941 = vmul.f32 %v939, 0.6
    %v942 = vmul.f32 %v940, 0.6
    %v943 = vmul.f32 %v918, 0.4
    %v944 = vmul.f32 %v919, 0.4
    %v945 = vadd.f32 %v941, %v943
    %v946 = vadd.f32 %v942, %v944
    %v947 = vsel %vm50, %v945, -1e+30
    %v948 = vsel %vm51, %v946, -1e+30
    %v949 = vsel %vm484, %v947, -inf
    %950 = vmax.xlane.f32.xlu0 %v949
    %v951 = vpop.xlane.xlu0 %950
    %v952 = vsel %vm484, %v948, -inf
    %953 = vmax.xlane.f32.xlu0 %v952
    %v954 = vpop.xlane.xlu0 %953
    %v955 = vsub.f32 %v947, %v951
    %v956 = vsub.f32 %v948, %v954
    %v957 = vmul.f32 %v955, 1.442695
    %v958 = vpow.pop %v957
    %v959 = vmul.f32 %v956, 1.442695
    %v960 = vpow.pop %v959
    %v961 = vsel %vm50, %v958, 0.0
    %v962 = vsel %vm51, %v960, 0.0
    %v963 = vsel %vm484, %v961, 0.0
    %964 = vadd.xlane.f32.xlu0 %v963
    %v965 = vpop.xlane.xlu0 %964
    %v966 = vsel %vm484, %v962, 0.0
    %967 = vadd.xlane.f32.xlu0 %v966
    %v968 = vpop.xlane.xlu0 %967
    %v969 = vmax.f32 %v965, 1e-30
    %v970 = vmax.f32 %v968, 1e-30
    %v971 = vrcp.pop %v969
    %v972 = vrcp.pop %v970
    %v973 = vmul.f32 %v969, %v971
    %v974 = vmul.f32 %v970, %v972
    %v975 = vsub.f32 2.0, %v973
    %v976 = vsub.f32 2.0, %v974
    %v977 = vmul.f32 %v971, %v975
    %v978 = vmul.f32 %v972, %v976
    %v979 = vmul.f32 %v961, %v977
    %v980 = vmul.f32 %v962, %v978
    %v981 = vlaneseq
    %v982 = vshrl.u32 %v981, 7
    %v983 = vsub.s32 7, %v982
    %v984 = vrot.slane %v612, %v983
    %v986 = vsel %vm484, %v979, 0
    %v989 = vsel %vm484, %v980, 0
    %991 = vmatprep.subr.mxu0 0.0
    %992 = vmatpush1.msra.mxu0 %v706
    %993 = vmatprep.subr.mxu0 0.0
    %994 = vmatpush1.msra.mxu0 %v708
    %995 = vmatprep.subr.mxu0 0.0
    %996 = vmatpush1.msra.mxu0 0.0
    %997 = vmatprep.subr.mxu0 0.0
    %998 = vmatpush1.msra.mxu0 0.0
    %999 = vmatprep.subr.mxu0 0.0
    %1000 = vmatpush1.msra.mxu0 0.0
    %1001 = vmatprep.subr.mxu0 0.0
    %1002 = vmatpush1.msra.mxu0 0.0
    %1003 = vmatprep.subr.mxu0 0.0
    %1004 = vmatpush1.msra.mxu0 0.0
    %1005 = vmatprep.subr.mxu0 0.0
    %1006 = vmatpush1.msra.mxu0 0.0
    %1007 = vmatprep.subr.mxu0 0.0
    %1008 = vmatpush1.msra.mxu0 0.0
    %1009 = vmatprep.subr.mxu0 0.0
    %1010 = vmatpush1.msra.mxu0 0.0
    %1011 = vmatprep.subr.mxu0 0.0
    %1012 = vmatpush1.msra.mxu0 0.0
    %1013 = vmatprep.subr.mxu0 0.0
    %1014 = vmatpush1.msra.mxu0 0.0
    %1015 = vmatprep.subr.mxu0 0.0
    %1016 = vmatpush1.msra.mxu0 0.0
    %1017 = vmatprep.subr.mxu0 0.0
    %1018 = vmatpush1.msra.mxu0 0.0
    %1019 = vmatprep.subr.mxu0 0.0
    %1020 = vmatpush1.msra.mxu0 0.0
    %1021 = vmatprep.subr.mxu0 0.0
    %1022 = vmatpush1.msra.mxu0 0.0
    %1023 = vmatprep.subr.mxu0 0.0
    %1024 = vmatpush1.msra.mxu0 0.0
    %1025 = vmatprep.subr.mxu0 0.0
    %1026 = vmatpush1.msra.mxu0 0.0
    %1027 = vmatprep.subr.mxu0 0.0
    %1028 = vmatpush1.msra.mxu0 0.0
    %1029 = vmatprep.subr.mxu0 0.0
    %1030 = vmatpush1.msra.mxu0 0.0
    %1031 = vmatprep.subr.mxu0 0.0
    %1032 = vmatpush1.msra.mxu0 0.0
    %1033 = vmatprep.subr.mxu0 0.0
    %1034 = vmatpush1.msra.mxu0 0.0
    %1035 = vmatprep.subr.mxu0 0.0
    %1036 = vmatpush1.msra.mxu0 0.0
    %1037 = vmatprep.subr.mxu0 0.0
    %1038 = vmatpush1.msra.mxu0 0.0
    %1039 = vmatprep.subr.mxu0 0.0
    %1040 = vmatpush1.msra.mxu0 0.0
    %1041 = vmatprep.subr.mxu0 0.0
    %1042 = vmatpush1.msra.mxu0 0.0
    %1043 = vmatprep.subr.mxu0 0.0
    %1044 = vmatpush1.msra.mxu0 0.0
    %1045 = vmatprep.subr.mxu0 0.0
    %1046 = vmatpush1.msra.mxu0 0.0
    %1047 = vmatprep.subr.mxu0 0.0
    %1048 = vmatpush1.msra.mxu0 0.0
    %1049 = vmatprep.subr.mxu0 0.0
    %1050 = vmatpush1.msra.mxu0 0.0
    %1051 = vmatprep.subr.mxu0 0.0
    %1052 = vmatpush1.msra.mxu0 0.0
    %1053 = vmatprep.subr.mxu0 0.0
    %1054 = vmatpush1.msra.mxu0 0.0
    %1055 = vmatprep.mubr.f32.mxu0 0.0
    %1056 = vmatmul.mubr.f32.gmra.mrb[0].mxu0 %v986
    %v1057 = vpop.f32.mrb[0].mxu0
    %v1058 = vadd.f32 %v984, %v1057
    %v1059 = vpop.f32.mrb[0].mxu0
    %1060 = vmatprep.mubr.f32.mxu0 0.0
    %1061 = vmatmul.mubr.f32.gmra.mrb[0].mxu0 %v989
    %v1062 = vpop.f32.mrb[0].mxu0
    %v1063 = vadd.f32 %v984, %v1062
    %v1064 = vpop.f32.mrb[0].mxu0
    %1065 = vdwg.mxu0
    %vm1066 = vcmask 31744
    %1067 = vst.msk [vmem:[%s6] sm:$0xff] %vm1066, %v1058
    %1068 = vst.msk [vmem:[%s6 + $0x8] sm:$0xff] %vm1066, %v1063
    // Predicated region
    $region34: #{attention_decoder.1} parent=1 // pred_check
      _
    $region35: #{attention_decoder.1} parent=1 // pred_check_branch
      %1070 = sbr.rel (0) target = $region37
    $region36: #{attention_decoder.1} parent=1 // pred_region
      _
    $region37: #{attention_decoder.1} parent=1 // pred_fallthru
      _
    // Predicated region
    $region38: #{attention_decoder.1} parent=1 // pred_check
      _
    $region39: #{attention_decoder.1} parent=1 // pred_check_branch
      %1072 = sbr.rel (0) target = $region41
    $region40: #{attention_decoder.1} parent=1 // pred_region
      _
    $region41: #{attention_decoder.1} parent=1 // pred_fallthru
      _
    %1073 = vsyncpa [#allocation3], 1
    %1074 = vsyncpa [#allocation5], 1

</llo_original>
